<compile_context>
chip_gen: v7x
topology: tpu7x:2x2x1
jax: 0.10.0
libtpu: 0.0.40
codegen_flags: <defaults>
</compile_context>

<pallas_src>
import functools

import jax
import jax.numpy as jnp
from jax import lax
from jax.experimental import pallas as pl
from jax.experimental.pallas import tpu as pltpu


# Sublane-aligned row count of the lane-dense (PACK, N) output slab.
PACK = 8
_ROW_CORRECT = 0
_ROW_TARGET = 1
_ROW_PRED = 2
_ROW_ACTUAL = 3
_ROW_OPTIMAL = 4

# Whether the in-kernel sublane<->lane swap may use the native minor-dim
# transpose.  Flipped to False (guaranteed broadcast/select/reduce fallback)
# the first time lowering of the native form fails on this JAX/libtpu combo.
_NATIVE_SWAP = [True]


# ---------------------------------------------------------------------------
# Sublane <-> lane swaps for per-row scalars (needed for lane-dense output).
# ---------------------------------------------------------------------------

def _col_to_row(col, native):
    """(T, 1) -> (1, T).  `native` uses the XLU minor-dim transpose; otherwise
    a guaranteed-lowering path using only broadcast / iota / select / reduce /
    128-aligned concatenation (processes 128 rows per chunk)."""
    if native:
        return jnp.transpose(col, (1, 0))
    t = col.shape[0]
    assert t <= 128 or t % 128 == 0, t
    w = min(t, 128)
    sub = lax.broadcasted_iota(jnp.int32, (w, w), 0)
    lane = lax.broadcasted_iota(jnp.int32, (w, w), 1)
    diag = sub == lane
    pieces = []
    for s in range(0, t, w):
        blk = jnp.broadcast_to(col[s:s + w, :], (w, w))     # blk[i, j] = col[s+i]
        pieces.append(jnp.sum(jnp.where(diag, blk, 0), axis=0, keepdims=True))
    return pieces[0] if len(pieces) == 1 else jnp.concatenate(pieces, axis=1)


def _row_to_col(row, native):
    """(1, T) -> (T, 1).  Mirror of _col_to_row."""
    if native:
        return jnp.transpose(row, (1, 0))
    t = row.shape[1]
    assert t <= 128 or t % 128 == 0, t
    w = min(t, 128)
    sub = lax.broadcasted_iota(jnp.int32, (w, w), 0)
    lane = lax.broadcasted_iota(jnp.int32, (w, w), 1)
    diag = sub == lane
    pieces = []
    for s in range(0, t, w):
        blk = jnp.broadcast_to(row[:, s:s + w], (w, w))     # blk[i, j] = row[s+j]
        pieces.append(jnp.sum(jnp.where(diag, blk, 0), axis=1, keepdims=True))
    return pieces[0] if len(pieces) == 1 else jnp.concatenate(pieces, axis=0)


# ---------------------------------------------------------------------------
# Kernel.
# ---------------------------------------------------------------------------

def _first_argmax(x, col_iota, n_classes):
    """Row-wise first-index argmax (== torch.argmax(dim=1) tie-break)."""
    if jnp.issubdtype(x.dtype, jnp.floating):
        # torch.argmax treats NaN as the maximum; map NaN -> +inf so a NaN row
        # still yields an in-range index.  (If a row mixes +inf and NaN the
        # first of either wins, where torch would pick the first NaN.)
        x = jnp.where(jnp.isnan(x), jnp.array(jnp.inf, dtype=x.dtype), x)
    mx = jnp.max(x, axis=-1, keepdims=True)
    return jnp.min(jnp.where(x == mx, col_iota, n_classes), axis=-1, keepdims=True)


def _metrics_kernel(labels_are_indices, has_runtimes, native_swap, *refs):
    """Per-tile body: argmax, compare, optional runtime gather, lane-dense store."""
    if has_runtimes:
        logits_ref, labels_ref, runtimes_ref, out_ref = refs
    else:
        logits_ref, labels_ref, out_ref = refs
        runtimes_ref = None

    logits = logits_ref[...]                                 # (T, C) native dtype
    T, C = logits.shape
    col = lax.broadcasted_iota(jnp.int32, (T, C), 1)

    pred_col = _first_argmax(logits, col, C)                 # (T, 1) int32
    pred_row = _col_to_row(pred_col.astype(jnp.float32), native_swap)   # (1, T) f32

    if labels_are_indices:
        tgt_row_i = labels_ref[...]                          # (1, T) int32, lane dense
        tgt_row = tgt_row_i.astype(jnp.float32)
        tgt_col = _row_to_col(tgt_row_i, native_swap) if has_runtimes else None
    else:
        tgt_col = _first_argmax(labels_ref[...], col, C)     # (T, 1) int32
        tgt_row = _col_to_row(tgt_col.astype(jnp.float32), native_swap)

    # Exact: both sides are integer-valued f32.
    correct_row = (pred_row == tgt_row).astype(jnp.float32)  # (1, T)

    # Single lane-dense (PACK, T) output block; unused rows zeroed, then each
    # result written as a full-width row (dense stores, one output DMA).
    out_ref[...] = jnp.zeros_like(out_ref)
    out_ref[pl.ds(_ROW_CORRECT, 1), :] = correct_row
    out_ref[pl.ds(_ROW_TARGET, 1), :] = tgt_row
    out_ref[pl.ds(_ROW_PRED, 1), :] = pred_row

    if has_runtimes:
        rt = runtimes_ref[...]                               # (T, C) native dtype
        # torch.gather(rt, 1, idx): vectorized one-hot masked row-sum (exact:
        # exactly one lane per row survives the select).
        actual_col = jnp.sum(jnp.where(col == pred_col, rt, 0),
                             axis=-1, keepdims=True)
        optimal_col = jnp.sum(jnp.where(col == tgt_col, rt, 0),
                              axis=-1, keepdims=True)
        out_ref[pl.ds(_ROW_ACTUAL, 1), :] = _col_to_row(
            actual_col.astype(jnp.float32), native_swap)
        out_ref[pl.ds(_ROW_OPTIMAL, 1), :] = _col_to_row(
            optimal_col.astype(jnp.float32), native_swap)


# ---------------------------------------------------------------------------
# Wrapper.
# ---------------------------------------------------------------------------

def _vmem_capacity_bytes():
    try:
        return int(pltpu.get_tpu_info().vmem_capacity_bytes)
    except Exception:
        return 128 * 1024 * 1024   # v5e/v6e default if the query is unavailable


def _choose_tile_n(n, row_bytes, vmem_bytes):
    """Sample-axis tile.  n<=128 -> a single full block; otherwise a multiple
    of 128 sized so the double-buffered blocks use ~1/8 of physical VMEM
    (~16 MiB on v5e/v6e's 128 MiB, ~8 MiB on v7x's 64 MiB per TensorCore),
    leaving headroom for in-kernel intermediates."""
    if n <= 128:
        return n
    budget = max(4 * 1024 * 1024, vmem_bytes // 8)
    t = budget // max(2 * row_bytes, 1)        # x2: Pallas double-buffers each block
    t = max(128, (t // 128) * 128)
    n_floor = (n // 128) * 128
    return min(t, n if n % 128 == 0 else n_floor)


def metrics(logits, labels, runtimes=None, *, tile_n=None):
    """Pallas-backed equivalent of Metrics.forward.

    Returns (accuracy, correct_preds, targets[, actual, optimal]).
    targets are int32 (PyTorch would return int64)."""
    N, C = logits.shape

    if labels.ndim == 1:
        labels_are_indices = True
        labels_in = labels.astype(jnp.int32).reshape(1, N)   # lane-dense (1, N) row
        labels_row_bytes = 4
    elif labels.ndim == 2:
        labels_are_indices = False
        labels_in = labels                                    # native dtype, no cast
        labels_row_bytes = C * labels.dtype.itemsize
    else:
        raise ValueError(
            f"labels={labels.shape} tensor is neither 1 nor 2-dimensional. :/")

    has_runtimes = runtimes is not None
    if has_runtimes:
        assert runtimes.shape == logits.shape, (
            f"We need to have a runtime for each sample and every possible label!"
            f"runtimes={runtimes.shape}, logits={logits.shape}.")

    row_bytes = C * logits.dtype.itemsize + labels_row_bytes + PACK * 4
    if has_runtimes:
        row_bytes += C * runtimes.dtype.itemsize

    vmem_bytes = _vmem_capacity_bytes()
    if tile_n is None:
        tile_n = _choose_tile_n(N, row_bytes, vmem_bytes)
    assert (N <= 128 and tile_n == N) or (tile_n % 128 == 0 and tile_n <= N), (
        tile_n, N)
    num_tiles = pl.cdiv(N, tile_n)

    big_spec = pl.BlockSpec((tile_n, C), lambda i: (i, 0))
    row_spec = pl.BlockSpec((1, tile_n), lambda i: (0, i))     # lane-dense labels
    out_spec = pl.BlockSpec((PACK, tile_n), lambda i: (0, i))  # lane-dense results

    in_specs = [big_spec, row_spec if labels_are_indices else big_spec]
    inputs = [logits, labels_in]
    if has_runtimes:
        in_specs.append(big_spec)
        inputs.append(runtimes)

    compiler_params = pltpu.CompilerParams(
        dimension_semantics=("parallel",),     # shard samples across TensorCores
        vmem_limit_bytes=min(vmem_bytes * 3 // 4, 96 * 1024 * 1024))

    def _run(native_swap):
        kernel = functools.partial(
            _metrics_kernel, labels_are_indices, has_runtimes, native_swap)
        return pl.pallas_call(
            kernel,
            grid=(num_tiles,),
            in_specs=in_specs,
            out_specs=out_spec,
            out_shape=jax.ShapeDtypeStruct((PACK, N), jnp.float32),
            compiler_params=compiler_params,
        )(*inputs)

    packed = None
    if _NATIVE_SWAP[0]:
        try:
            packed = _run(True)
        except Exception:
            # Native minor-dim transpose did not lower on this JAX/libtpu;
            # use the guaranteed broadcast/select/reduce swap from now on.
            _NATIVE_SWAP[0] = False
    if packed is None:
        packed = _run(False)

    correct = packed[_ROW_CORRECT, :]          # contiguous row reads of the slab
    accuracy = jnp.mean(correct)               # trivial reduction, in the wrapper
    if labels_are_indices:
        targets = labels.astype(jnp.int32)     # targets are just the labels
    else:
        targets = packed[_ROW_TARGET, :].astype(jnp.int32)

    ret = (accuracy, correct, targets)
    if has_runtimes:
        actual = packed[_ROW_ACTUAL, :].astype(runtimes.dtype)
        optimal = packed[_ROW_OPTIMAL, :].astype(runtimes.dtype)
        ret += (actual, optimal)
    return ret


if __name__ == "__main__":
    N, C = 8, 32  # batch (samples), num classes
    key = jax.random.PRNGKey(0)
    k_logits, k_labels, k_runtimes = jax.random.split(key, 3)

    logits = jax.random.normal(k_logits, (N, C), dtype=jnp.float32)
    label_idx = jax.random.randint(k_labels, (N,), 0, C, dtype=jnp.int32)
    labels_onehot = jax.nn.one_hot(label_idx, C, dtype=jnp.float32)
    runtimes = jax.random.uniform(k_runtimes, (N, C), dtype=jnp.float32)

    # Pure-JAX reference.
    pred_ref = jnp.argmax(logits, axis=1)
    correct_ref = (pred_ref == label_idx).astype(jnp.float32)
    acc_ref = jnp.mean(correct_ref)
    actual_ref = runtimes[jnp.arange(N), pred_ref]
    optimal_ref = runtimes[jnp.arange(N), label_idx]

    # 1) 2-D (one-hot) labels + runtimes.
    acc, correct, tgt, actual, optimal = metrics(logits, labels_onehot, runtimes)
    jax.block_until_ready((acc, correct, tgt, actual, optimal))
    assert jnp.allclose(acc, acc_ref), (acc, acc_ref)
    assert jnp.array_equal(tgt, label_idx)
    assert jnp.array_equal(correct, correct_ref)
    assert jnp.allclose(actual, actual_ref)
    assert jnp.allclose(optimal, optimal_ref)

    # 2) 1-D (index) labels, no runtimes.
    acc2, correct2, tgt2 = metrics(logits, label_idx)
    jax.block_until_ready((acc2, correct2, tgt2))
    assert jnp.allclose(acc2, acc_ref)
    assert jnp.array_equal(tgt2, label_idx)
    assert jnp.array_equal(correct2, correct_ref)

    # 3) 1-D labels + runtimes.
    acc3, correct3, tgt3, actual3, optimal3 = metrics(logits, label_idx, runtimes)
    jax.block_until_ready((acc3, actual3, optimal3))
    assert jnp.allclose(acc3, acc_ref)
    assert jnp.allclose(actual3, actual_ref)
    assert jnp.allclose(optimal3, optimal_ref)

    # 4) 2-D labels, no runtimes.
    acc4, correct4, tgt4 = metrics(logits, labels_onehot)
    jax.block_until_ready((acc4,))
    assert jnp.allclose(acc4, acc_ref)
    assert jnp.array_equal(tgt4, label_idx)

    # 5) Multi-tile grid with a remainder tile (N=300, TILE_N=128 -> 3 tiles).
    N2 = 300
    kl2, kr2, kb2 = jax.random.split(jax.random.PRNGKey(1), 3)
    logits2 = jax.random.normal(kl2, (N2, C), dtype=jnp.float32)
    labels2 = jax.random.randint(kb2, (N2,), 0, C, dtype=jnp.int32)
    runtimes2 = jax.random.uniform(kr2, (N2, C), dtype=jnp.float32)
    acc5, correct5, tgt5, actual5, optimal5 = metrics(
        logits2, labels2, runtimes2, tile_n=128)
    jax.block_until_ready((acc5, correct5, tgt5, actual5, optimal5))
    pred2 = jnp.argmax(logits2, axis=1)
    assert jnp.allclose(acc5, jnp.mean((pred2 == labels2).astype(jnp.float32)))
    assert jnp.array_equal(tgt5, labels2)
    assert jnp.allclose(actual5, runtimes2[jnp.arange(N2), pred2])
    assert jnp.allclose(optimal5, runtimes2[jnp.arange(N2), labels2])

    # 6) bf16 logits/runtimes stay in native dtype through the kernel.
    N3 = 16
    kl3, kr3, kb3 = jax.random.split(jax.random.PRNGKey(2), 3)
    logits3 = jax.random.normal(kl3, (N3, C), dtype=jnp.bfloat16)
    labels3 = jax.random.randint(kb3, (N3,), 0, C, dtype=jnp.int32)
    runtimes3 = jax.random.uniform(kr3, (N3, C), dtype=jnp.bfloat16)
    acc6, correct6, tgt6, actual6, optimal6 = metrics(logits3, labels3, runtimes3)
    jax.block_until_ready((acc6, actual6, optimal6))
    pred3 = jnp.argmax(logits3, axis=1)
    assert jnp.allclose(acc6, jnp.mean((pred3 == labels3).astype(jnp.float32)))
    assert jnp.array_equal(tgt6, labels3)
    assert jnp.array_equal(actual6, runtimes3[jnp.arange(N3), pred3])
    assert jnp.array_equal(optimal6, runtimes3[jnp.arange(N3), labels3])

    print("KERNEL_OK")
</pallas_src>

<mosaic_0001>
module attributes {stable_mosaic.version = 11 : i64} {
  func.func @_metrics_kernel(%arg0: i32, %arg1: memref<8x32xf32, #tpu.memory_space<vmem>>, %arg2: memref<8x32xf32, #tpu.memory_space<vmem>>, %arg3: memref<8x32xf32, #tpu.memory_space<vmem>>, %arg4: memref<8x8xf32, #tpu.memory_space<vmem>>) attributes {dimension_semantics = [#tpu.dimension_semantics<parallel>], iteration_bounds = array<i64: 1>, scalar_prefetch = 0 : i64, scratch_operands = 0 : i64, tpu.core_type = #tpu.core_type<tc>, window_params = [{transform_indices = @transform_0, window_bounds = array<i64: 8, 32>}, {transform_indices = @transform_1, window_bounds = array<i64: 8, 32>}, {transform_indices = @transform_2, window_bounds = array<i64: 8, 32>}, {transform_indices = @transform_3, window_bounds = array<i64: 8, 8>}]} {
    %c0 = arith.constant 0 : index
    %c0_0 = arith.constant 0 : index
    %0 = vector.load %arg1[%c0, %c0_0] : memref<8x32xf32, #tpu.memory_space<vmem>>, vector<8x32xf32>
    %1 = tpu.iota {dimensions = array<i32: 1>} : vector<8x32xi32>
    %2 = arith.cmpf one, %0, %0 : vector<8x32xf32>
    %cst = arith.constant 0x7F800000 : f32
    %3 = vector.broadcast %cst : f32 to vector<8x32xf32>
    %4 = arith.select %2, %3, %0 : vector<8x32xi1>, vector<8x32xf32>
    %cst_1 = arith.constant dense<0xFF800000> : vector<8xf32>
    %5 = vector.multi_reduction <maximumf>, %4, %cst_1 [1] : vector<8x32xf32> to vector<8xf32>
    %6 = vector.shape_cast %5 : vector<8xf32> to vector<8x1xf32>
    %7 = vector.broadcast %6 : vector<8x1xf32> to vector<8x32xf32>
    %8 = arith.cmpf oeq, %4, %7 : vector<8x32xf32>
    %c32_i32 = arith.constant 32 : i32
    %9 = vector.broadcast %c32_i32 : i32 to vector<8x32xi32>
    %10 = arith.select %8, %1, %9 : vector<8x32xi1>, vector<8x32xi32>
    %cst_2 = arith.constant dense<2147483647> : vector<8xi32>
    %11 = vector.multi_reduction <minsi>, %10, %cst_2 [1] : vector<8x32xi32> to vector<8xi32>
    %12 = vector.shape_cast %11 : vector<8xi32> to vector<8x1xi32>
    %13 = arith.sitofp %12 : vector<8x1xi32> to vector<8x1xf32>
    %14 = tpu.transpose %13, [1, 0] : vector<8x1xf32> -> vector<1x8xf32>
    %c0_3 = arith.constant 0 : index
    %c0_4 = arith.constant 0 : index
    %15 = vector.load %arg2[%c0_3, %c0_4] : memref<8x32xf32, #tpu.memory_space<vmem>>, vector<8x32xf32>
    %16 = arith.cmpf one, %15, %15 : vector<8x32xf32>
    %cst_5 = arith.constant 0x7F800000 : f32
    %17 = vector.broadcast %cst_5 : f32 to vector<8x32xf32>
    %18 = arith.select %16, %17, %15 : vector<8x32xi1>, vector<8x32xf32>
    %cst_6 = arith.constant dense<0xFF800000> : vector<8xf32>
    %19 = vector.multi_reduction <maximumf>, %18, %cst_6 [1] : vector<8x32xf32> to vector<8xf32>
    %20 = vector.shape_cast %19 : vector<8xf32> to vector<8x1xf32>
    %21 = vector.broadcast %20 : vector<8x1xf32> to vector<8x32xf32>
    %22 = arith.cmpf oeq, %18, %21 : vector<8x32xf32>
    %c32_i32_7 = arith.constant 32 : i32
    %23 = vector.broadcast %c32_i32_7 : i32 to vector<8x32xi32>
    %24 = arith.select %22, %1, %23 : vector<8x32xi1>, vector<8x32xi32>
    %cst_8 = arith.constant dense<2147483647> : vector<8xi32>
    %25 = vector.multi_reduction <minsi>, %24, %cst_8 [1] : vector<8x32xi32> to vector<8xi32>
    %26 = vector.shape_cast %25 : vector<8xi32> to vector<8x1xi32>
    %27 = arith.sitofp %26 : vector<8x1xi32> to vector<8x1xf32>
    %28 = tpu.transpose %27, [1, 0] : vector<8x1xf32> -> vector<1x8xf32>
    %29 = arith.cmpf oeq, %14, %28 : vector<1x8xf32>
    %30 = arith.extui %29 : vector<1x8xi1> to vector<1x8xi32>
    %31 = arith.sitofp %30 : vector<1x8xi32> to vector<1x8xf32>
    %cst_9 = arith.constant 0.000000e+00 : f32
    %32 = vector.broadcast %cst_9 : f32 to vector<8x8xf32>
    %c0_10 = arith.constant 0 : index
    %c0_11 = arith.constant 0 : index
    %33 = vector.load %arg4[%c0_10, %c0_11] : memref<8x8xf32, #tpu.memory_space<vmem>>, vector<8x8xf32>
    tpu.vector_store %arg4[%c0_10, %c0_11], %32 {strides = array<i32>} : memref<8x8xf32, #tpu.memory_space<vmem>>, vector<8x8xf32>,
    %c0_12 = arith.constant 0 : index
    %c0_13 = arith.constant 0 : index
    %34 = vector.load %arg4[%c0_12, %c0_13] : memref<8x8xf32, #tpu.memory_space<vmem>>, vector<1x8xf32>
    tpu.vector_store %arg4[%c0_12, %c0_13], %31 {strides = array<i32>} : memref<8x8xf32, #tpu.memory_space<vmem>>, vector<1x8xf32>,
    %c1 = arith.constant 1 : index
    %c0_14 = arith.constant 0 : index
    %35 = vector.load %arg4[%c1, %c0_14] : memref<8x8xf32, #tpu.memory_space<vmem>>, vector<1x8xf32>
    tpu.vector_store %arg4[%c1, %c0_14], %28 {strides = array<i32>} : memref<8x8xf32, #tpu.memory_space<vmem>>, vector<1x8xf32>,
    %c2 = arith.constant 2 : index
    %c0_15 = arith.constant 0 : index
    %36 = vector.load %arg4[%c2, %c0_15] : memref<8x8xf32, #tpu.memory_space<vmem>>, vector<1x8xf32>
    tpu.vector_store %arg4[%c2, %c0_15], %14 {strides = array<i32>} : memref<8x8xf32, #tpu.memory_space<vmem>>, vector<1x8xf32>,
    %c0_16 = arith.constant 0 : index
    %c0_17 = arith.constant 0 : index
    %37 = vector.load %arg3[%c0_16, %c0_17] : memref<8x32xf32, #tpu.memory_space<vmem>>, vector<8x32xf32>
    %38 = vector.broadcast %12 : vector<8x1xi32> to vector<8x32xi32>
    %39 = arith.cmpi eq, %1, %38 : vector<8x32xi32>
    %c0_i32 = arith.constant 0 : i32
    %40 = arith.sitofp %c0_i32 : i32 to f32
    %41 = vector.broadcast %40 : f32 to vector<8x32xf32>
    %42 = arith.select %39, %37, %41 : vector<8x32xi1>, vector<8x32xf32>
    %cst_18 = arith.constant dense<0.000000e+00> : vector<8xf32>
    %43 = vector.multi_reduction <add>, %42, %cst_18 [1] : vector<8x32xf32> to vector<8xf32>
    %44 = vector.shape_cast %43 : vector<8xf32> to vector<8x1xf32>
    %45 = vector.broadcast %26 : vector<8x1xi32> to vector<8x32xi32>
    %46 = arith.cmpi eq, %1, %45 : vector<8x32xi32>
    %c0_i32_19 = arith.constant 0 : i32
    %47 = arith.sitofp %c0_i32_19 : i32 to f32
    %48 = vector.broadcast %47 : f32 to vector<8x32xf32>
    %49 = arith.select %46, %37, %48 : vector<8x32xi1>, vector<8x32xf32>
    %cst_20 = arith.constant dense<0.000000e+00> : vector<8xf32>
    %50 = vector.multi_reduction <add>, %49, %cst_20 [1] : vector<8x32xf32> to vector<8xf32>
    %51 = vector.shape_cast %50 : vector<8xf32> to vector<8x1xf32>
    %52 = tpu.transpose %44, [1, 0] : vector<8x1xf32> -> vector<1x8xf32>
    %c3 = arith.constant 3 : index
    %c0_21 = arith.constant 0 : index
    %53 = vector.load %arg4[%c3, %c0_21] : memref<8x8xf32, #tpu.memory_space<vmem>>, vector<1x8xf32>
    tpu.vector_store %arg4[%c3, %c0_21], %52 {strides = array<i32>} : memref<8x8xf32, #tpu.memory_space<vmem>>, vector<1x8xf32>,
    %54 = tpu.transpose %51, [1, 0] : vector<8x1xf32> -> vector<1x8xf32>
    %c4 = arith.constant 4 : index
    %c0_22 = arith.constant 0 : index
    %55 = vector.load %arg4[%c4, %c0_22] : memref<8x8xf32, #tpu.memory_space<vmem>>, vector<1x8xf32>
    tpu.vector_store %arg4[%c4, %c0_22], %54 {strides = array<i32>} : memref<8x8xf32, #tpu.memory_space<vmem>>, vector<1x8xf32>,
    return
  }
  func.func @transform_0(%arg0: i32) -> (i32, i32) {
    %c0_i32 = arith.constant 0 : i32
    %c0_i32_0 = arith.constant 0 : i32
    return %arg0, %c0_i32 : i32, i32
  }
  func.func @transform_1(%arg0: i32) -> (i32, i32) {
    %c0_i32 = arith.constant 0 : i32
    %c0_i32_0 = arith.constant 0 : i32
    return %arg0, %c0_i32 : i32, i32
  }
  func.func @transform_2(%arg0: i32) -> (i32, i32) {
    %c0_i32 = arith.constant 0 : i32
    %c0_i32_0 = arith.constant 0 : i32
    return %arg0, %c0_i32 : i32, i32
  }
  func.func @transform_3(%arg0: i32) -> (i32, i32) {
    %c0_i32 = arith.constant 0 : i32
    %c0_i32_0 = arith.constant 0 : i32
    return %c0_i32, %arg0 : i32, i32
  }
}

module attributes {stable_mosaic.version = 11 : i64} {
  func.func @_metrics_kernel(%arg0: i32, %arg1: memref<8x32xf32, #tpu.memory_space<vmem>>, %arg2: memref<8x32xf32, #tpu.memory_space<vmem>>, %arg3: memref<8x32xf32, #tpu.memory_space<vmem>>, %arg4: memref<8x8xf32, #tpu.memory_space<vmem>>) attributes {dimension_semantics = [#tpu.dimension_semantics<parallel>], iteration_bounds = array<i64: 1>, scalar_prefetch = 0 : i64, scratch_operands = 0 : i64, tpu.core_type = #tpu.core_type<tc>, window_params = [{transform_indices = @transform_0, window_bounds = array<i64: 8, 32>}, {transform_indices = @transform_1, window_bounds = array<i64: 8, 32>}, {transform_indices = @transform_2, window_bounds = array<i64: 8, 32>}, {transform_indices = @transform_3, window_bounds = array<i64: 8, 8>}]} {
    %c0 = arith.constant 0 : index
    %c0_0 = arith.constant 0 : index
    %0 = vector.load %arg1[%c0, %c0_0] : memref<8x32xf32, #tpu.memory_space<vmem>>, vector<8x32xf32>
    %1 = tpu.iota {dimensions = array<i32: 1>} : vector<8x32xi32>
    %2 = arith.cmpf one, %0, %0 : vector<8x32xf32>
    %cst = arith.constant 0x7F800000 : f32
    %3 = vector.broadcast %cst : f32 to vector<8x32xf32>
    %4 = arith.select %2, %3, %0 : vector<8x32xi1>, vector<8x32xf32>
    %cst_1 = arith.constant dense<0xFF800000> : vector<8xf32>
    %5 = vector.multi_reduction <maximumf>, %4, %cst_1 [1] : vector<8x32xf32> to vector<8xf32>
    %6 = vector.shape_cast %5 : vector<8xf32> to vector<8x1xf32>
    %7 = vector.broadcast %6 : vector<8x1xf32> to vector<8x32xf32>
    %8 = arith.cmpf oeq, %4, %7 : vector<8x32xf32>
    %c32_i32 = arith.constant 32 : i32
    %9 = vector.broadcast %c32_i32 : i32 to vector<8x32xi32>
    %10 = arith.select %8, %1, %9 : vector<8x32xi1>, vector<8x32xi32>
    %cst_2 = arith.constant dense<2147483647> : vector<8xi32>
    %11 = vector.multi_reduction <minsi>, %10, %cst_2 [1] : vector<8x32xi32> to vector<8xi32>
    %12 = vector.shape_cast %11 : vector<8xi32> to vector<8x1xi32>
    %13 = arith.sitofp %12 : vector<8x1xi32> to vector<8x1xf32>
    %14 = tpu.iota {dimensions = array<i32: 0>} : vector<8x8xi32>
    %15 = tpu.iota {dimensions = array<i32: 1>} : vector<8x8xi32>
    %16 = arith.cmpi eq, %14, %15 : vector<8x8xi32>
    %17 = vector.shape_cast %13 : vector<8x1xf32> to vector<8x1xf32>
    %18 = vector.broadcast %17 : vector<8x1xf32> to vector<8x8xf32>
    %c0_i32 = arith.constant 0 : i32
    %19 = arith.sitofp %c0_i32 : i32 to f32
    %20 = vector.broadcast %19 : f32 to vector<8x8xf32>
    %21 = arith.select %16, %18, %20 : vector<8x8xi1>, vector<8x8xf32>
    %cst_3 = arith.constant dense<0.000000e+00> : vector<8xf32>
    %22 = vector.multi_reduction <add>, %21, %cst_3 [0] : vector<8x8xf32> to vector<8xf32>
    %23 = vector.shape_cast %22 : vector<8xf32> to vector<1x8xf32>
    %c0_4 = arith.constant 0 : index
    %c0_5 = arith.constant 0 : index
    %24 = vector.load %arg2[%c0_4, %c0_5] : memref<8x32xf32, #tpu.memory_space<vmem>>, vector<8x32xf32>
    %25 = arith.cmpf one, %24, %24 : vector<8x32xf32>
    %cst_6 = arith.constant 0x7F800000 : f32
    %26 = vector.broadcast %cst_6 : f32 to vector<8x32xf32>
    %27 = arith.select %25, %26, %24 : vector<8x32xi1>, vector<8x32xf32>
    %cst_7 = arith.constant dense<0xFF800000> : vector<8xf32>
    %28 = vector.multi_reduction <maximumf>, %27, %cst_7 [1] : vector<8x32xf32> to vector<8xf32>
    %29 = vector.shape_cast %28 : vector<8xf32> to vector<8x1xf32>
    %30 = vector.broadcast %29 : vector<8x1xf32> to vector<8x32xf32>
    %31 = arith.cmpf oeq, %27, %30 : vector<8x32xf32>
    %c32_i32_8 = arith.constant 32 : i32
    %32 = vector.broadcast %c32_i32_8 : i32 to vector<8x32xi32>
    %33 = arith.select %31, %1, %32 : vector<8x32xi1>, vector<8x32xi32>
    %cst_9 = arith.constant dense<2147483647> : vector<8xi32>
    %34 = vector.multi_reduction <minsi>, %33, %cst_9 [1] : vector<8x32xi32> to vector<8xi32>
    %35 = vector.shape_cast %34 : vector<8xi32> to vector<8x1xi32>
    %36 = arith.sitofp %35 : vector<8x1xi32> to vector<8x1xf32>
    %37 = tpu.iota {dimensions = array<i32: 0>} : vector<8x8xi32>
    %38 = tpu.iota {dimensions = array<i32: 1>} : vector<8x8xi32>
    %39 = arith.cmpi eq, %37, %38 : vector<8x8xi32>
    %40 = vector.shape_cast %36 : vector<8x1xf32> to vector<8x1xf32>
    %41 = vector.broadcast %40 : vector<8x1xf32> to vector<8x8xf32>
    %c0_i32_10 = arith.constant 0 : i32
    %42 = arith.sitofp %c0_i32_10 : i32 to f32
    %43 = vector.broadcast %42 : f32 to vector<8x8xf32>
    %44 = arith.select %39, %41, %43 : vector<8x8xi1>, vector<8x8xf32>
    %cst_11 = arith.constant dense<0.000000e+00> : vector<8xf32>
    %45 = vector.multi_reduction <add>, %44, %cst_11 [0] : vector<8x8xf32> to vector<8xf32>
    %46 = vector.shape_cast %45 : vector<8xf32> to vector<1x8xf32>
    %47 = arith.cmpf oeq, %23, %46 : vector<1x8xf32>
    %48 = arith.extui %47 : vector<1x8xi1> to vector<1x8xi32>
    %49 = arith.sitofp %48 : vector<1x8xi32> to vector<1x8xf32>
    %cst_12 = arith.constant 0.000000e+00 : f32
    %50 = vector.broadcast %cst_12 : f32 to vector<8x8xf32>
    %c0_13 = arith.constant 0 : index
    %c0_14 = arith.constant 0 : index
    %51 = vector.load %arg4[%c0_13, %c0_14] : memref<8x8xf32, #tpu.memory_space<vmem>>, vector<8x8xf32>
    tpu.vector_store %arg4[%c0_13, %c0_14], %50 {strides = array<i32>} : memref<8x8xf32, #tpu.memory_space<vmem>>, vector<8x8xf32>,
    %c0_15 = arith.constant 0 : index
    %c0_16 = arith.constant 0 : index
    %52 = vector.load %arg4[%c0_15, %c0_16] : memref<8x8xf32, #tpu.memory_space<vmem>>, vector<1x8xf32>
    tpu.vector_store %arg4[%c0_15, %c0_16], %49 {strides = array<i32>} : memref<8x8xf32, #tpu.memory_space<vmem>>, vector<1x8xf32>,
    %c1 = arith.constant 1 : index
    %c0_17 = arith.constant 0 : index
    %53 = vector.load %arg4[%c1, %c0_17] : memref<8x8xf32, #tpu.memory_space<vmem>>, vector<1x8xf32>
    tpu.vector_store %arg4[%c1, %c0_17], %46 {strides = array<i32>} : memref<8x8xf32, #tpu.memory_space<vmem>>, vector<1x8xf32>,
    %c2 = arith.constant 2 : index
    %c0_18 = arith.constant 0 : index
    %54 = vector.load %arg4[%c2, %c0_18] : memref<8x8xf32, #tpu.memory_space<vmem>>, vector<1x8xf32>
    tpu.vector_store %arg4[%c2, %c0_18], %23 {strides = array<i32>} : memref<8x8xf32, #tpu.memory_space<vmem>>, vector<1x8xf32>,
    %c0_19 = arith.constant 0 : index
    %c0_20 = arith.constant 0 : index
    %55 = vector.load %arg3[%c0_19, %c0_20] : memref<8x32xf32, #tpu.memory_space<vmem>>, vector<8x32xf32>
    %56 = vector.broadcast %12 : vector<8x1xi32> to vector<8x32xi32>
    %57 = arith.cmpi eq, %1, %56 : vector<8x32xi32>
    %c0_i32_21 = arith.constant 0 : i32
    %58 = arith.sitofp %c0_i32_21 : i32 to f32
    %59 = vector.broadcast %58 : f32 to vector<8x32xf32>
    %60 = arith.select %57, %55, %59 : vector<8x32xi1>, vector<8x32xf32>
    %cst_22 = arith.constant dense<0.000000e+00> : vector<8xf32>
    %61 = vector.multi_reduction <add>, %60, %cst_22 [1] : vector<8x32xf32> to vector<8xf32>
    %62 = vector.shape_cast %61 : vector<8xf32> to vector<8x1xf32>
    %63 = vector.broadcast %35 : vector<8x1xi32> to vector<8x32xi32>
    %64 = arith.cmpi eq, %1, %63 : vector<8x32xi32>
    %c0_i32_23 = arith.constant 0 : i32
    %65 = arith.sitofp %c0_i32_23 : i32 to f32
    %66 = vector.broadcast %65 : f32 to vector<8x32xf32>
    %67 = arith.select %64, %55, %66 : vector<8x32xi1>, vector<8x32xf32>
    %cst_24 = arith.constant dense<0.000000e+00> : vector<8xf32>
    %68 = vector.multi_reduction <add>, %67, %cst_24 [1] : vector<8x32xf32> to vector<8xf32>
    %69 = vector.shape_cast %68 : vector<8xf32> to vector<8x1xf32>
    %70 = tpu.iota {dimensions = array<i32: 0>} : vector<8x8xi32>
    %71 = tpu.iota {dimensions = array<i32: 1>} : vector<8x8xi32>
    %72 = arith.cmpi eq, %70, %71 : vector<8x8xi32>
    %73 = vector.shape_cast %62 : vector<8x1xf32> to vector<8x1xf32>
    %74 = vector.broadcast %73 : vector<8x1xf32> to vector<8x8xf32>
    %c0_i32_25 = arith.constant 0 : i32
    %75 = arith.sitofp %c0_i32_25 : i32 to f32
    %76 = vector.broadcast %75 : f32 to vector<8x8xf32>
    %77 = arith.select %72, %74, %76 : vector<8x8xi1>, vector<8x8xf32>
    %cst_26 = arith.constant dense<0.000000e+00> : vector<8xf32>
    %78 = vector.multi_reduction <add>, %77, %cst_26 [0] : vector<8x8xf32> to vector<8xf32>
    %79 = vector.shape_cast %78 : vector<8xf32> to vector<1x8xf32>
    %c3 = arith.constant 3 : index
    %c0_27 = arith.constant 0 : index
    %80 = vector.load %arg4[%c3, %c0_27] : memref<8x8xf32, #tpu.memory_space<vmem>>, vector<1x8xf32>
    tpu.vector_store %arg4[%c3, %c0_27], %79 {strides = array<i32>} : memref<8x8xf32, #tpu.memory_space<vmem>>, vector<1x8xf32>,
    %81 = tpu.iota {dimensions = array<i32: 0>} : vector<8x8xi32>
    %82 = tpu.iota {dimensions = array<i32: 1>} : vector<8x8xi32>
    %83 = arith.cmpi eq, %81, %82 : vector<8x8xi32>
    %84 = vector.shape_cast %69 : vector<8x1xf32> to vector<8x1xf32>
    %85 = vector.broadcast %84 : vector<8x1xf32> to vector<8x8xf32>
    %c0_i32_28 = arith.constant 0 : i32
    %86 = arith.sitofp %c0_i32_28 : i32 to f32
    %87 = vector.broadcast %86 : f32 to vector<8x8xf32>
    %88 = arith.select %83, %85, %87 : vector<8x8xi1>, vector<8x8xf32>
    %cst_29 = arith.constant dense<0.000000e+00> : vector<8xf32>
    %89 = vector.multi_reduction <add>, %88, %cst_29 [0] : vector<8x8xf32> to vector<8xf32>
    %90 = vector.shape_cast %89 : vector<8xf32> to vector<1x8xf32>
    %c4 = arith.constant 4 : index
    %c0_30 = arith.constant 0 : index
    %91 = vector.load %arg4[%c4, %c0_30] : memref<8x8xf32, #tpu.memory_space<vmem>>, vector<1x8xf32>
    tpu.vector_store %arg4[%c4, %c0_30], %90 {strides = array<i32>} : memref<8x8xf32, #tpu.memory_space<vmem>>, vector<1x8xf32>,
    return
  }
  func.func @transform_0(%arg0: i32) -> (i32, i32) {
    %c0_i32 = arith.constant 0 : i32
    %c0_i32_0 = arith.constant 0 : i32
    return %arg0, %c0_i32 : i32, i32
  }
  func.func @transform_1(%arg0: i32) -> (i32, i32) {
    %c0_i32 = arith.constant 0 : i32
    %c0_i32_0 = arith.constant 0 : i32
    return %arg0, %c0_i32 : i32, i32
  }
  func.func @transform_2(%arg0: i32) -> (i32, i32) {
    %c0_i32 = arith.constant 0 : i32
    %c0_i32_0 = arith.constant 0 : i32
    return %arg0, %c0_i32 : i32, i32
  }
  func.func @transform_3(%arg0: i32) -> (i32, i32) {
    %c0_i32 = arith.constant 0 : i32
    %c0_i32_0 = arith.constant 0 : i32
    return %c0_i32, %arg0 : i32, i32
  }
}

</mosaic_0001>

<llo_original>
// kernel: tpu_custom_call.1
$region0: #{tpu_custom_call.1}
  #allocation0 [shape = 'u32[]', space=smem, size = 0x4, offset = 0x4, fixed_abs, tag = 'smem constant byte address 0x4 - core index']
  #allocation1 [shape = 'u32[144,128]{1,0:T(1,128)}', space=vmem, size = 0x12000, scoped, tag = 'internal scratch']
  %s0 = inlined_call_operand.hbm [shape: f32[8,32], index: 0, kind: input, shape index: {}]
  %s1 = inlined_call_operand.hbm [shape: f32[8,32], index: 1, kind: input, shape index: {}]
  %s2 = inlined_call_operand.hbm [shape: f32[8,32], index: 2, kind: input, shape index: {}]
  %s3 = inlined_call_operand.hbm [shape: f32[8,8], index: 3, kind: output, shape index: {}]
  %s4 = sld [smem:[#allocation0]]
  $region34: #{tpu_custom_call.1} parent=0
    _
  %s6 = ssub.s32 1, %s4
  %s7 = scalar_select 0, %s6, %s4
  $region1: #{tpu_custom_call.1} parent=0
    #allocation2 [shape = 'u8[4096]{0}', space=vmem, size = 0x1000, scoped, tag = 'input window, operand 0, single buffered']
    #allocation3 [shape = 's32[1]{0}', space=sflag, size = 0x4, scoped, tag = 'scoped memory for tpu_custom_call.1']
    #allocation4 [shape = 's32[1]{0}', space=sflag, size = 0x4, scoped, tag = 'scoped memory for tpu_custom_call.1']
    #allocation5 [shape = 'u8[4096]{0}', space=vmem, size = 0x1000, scoped, tag = 'input window, operand 1, single buffered']
    #allocation6 [shape = 's32[1]{0}', space=sflag, size = 0x4, scoped, tag = 'scoped memory for tpu_custom_call.1']
    #allocation7 [shape = 'u8[4096]{0}', space=vmem, size = 0x1000, scoped, tag = 'input window, operand 2, single buffered']
    #allocation8 [shape = 'u8[4096]{0}', space=vmem, size = 0x1000, scoped, tag = 'output window, operand 0, single buffered']
    %8 = vsyncpa [#allocation3], 0
    %9 = vsyncpa [#allocation6], 0
    %10 = vsyncpa [#allocation4], 0
    // Predicated region
    $region2: #{tpu_custom_call.1} parent=1 // pred_check
      _
    $region3: #{tpu_custom_call.1} parent=1 // pred_check_branch
      %12 = sbr.rel (0) target = $region5
    $region4: #{tpu_custom_call.1} parent=1 // pred_region
      %s14 = ssub.s32 128, 128
      %15 = vsyncadd [#allocation3], %s14
      %s17 = sshll.u32 [#allocation2], 4
      %s18 = int_to_ptr.vmem [resolvable:$true] %s17
      %20 = dma.hbm_to_vmem [thread:$0]  %s0, 128, %s18, [#allocation3]
    $region5: #{tpu_custom_call.1} parent=1 // pred_fallthru
      _
    // Predicated region
    $region6: #{tpu_custom_call.1} parent=1 // pred_check
      _
    $region7: #{tpu_custom_call.1} parent=1 // pred_check_branch
      %22 = sbr.rel (0) target = $region9
    $region8: #{tpu_custom_call.1} parent=1 // pred_region
      %s24 = ssub.s32 128, 128
      %25 = vsyncadd [#allocation6], %s24
      %s27 = sshll.u32 [#allocation5], 4
      %s28 = int_to_ptr.vmem [resolvable:$true] %s27
      %30 = dma.hbm_to_vmem [thread:$0]  %s1, 128, %s28, [#allocation6]
    $region9: #{tpu_custom_call.1} parent=1 // pred_fallthru
      _
    // Predicated region
    $region10: #{tpu_custom_call.1} parent=1 // pred_check
      _
    $region11: #{tpu_custom_call.1} parent=1 // pred_check_branch
      %32 = sbr.rel (0) target = $region13
    $region12: #{tpu_custom_call.1} parent=1 // pred_region
      %s34 = ssub.s32 128, 128
      %35 = vsyncadd [#allocation6], %s34
      %s37 = sshll.u32 [#allocation7], 4
      %s38 = int_to_ptr.vmem [resolvable:$true] %s37
      %40 = dma.hbm_to_vmem [thread:$0]  %s2, 128, %s38, [#allocation6]
    $region13: #{tpu_custom_call.1} parent=1 // pred_fallthru
      _
    // Predicated region
    $region14: #{tpu_custom_call.1} parent=1 // pred_check
      _
    $region15: #{tpu_custom_call.1} parent=1 // pred_check_branch
      %42 = sbr.rel (0) target = $region17
    $region16: #{tpu_custom_call.1} parent=1 // pred_region
      %43 = dma.done [#allocation3], 128
    $region17: #{tpu_custom_call.1} parent=1 // pred_fallthru
      _
    // Predicated region
    $region18: #{tpu_custom_call.1} parent=1 // pred_check
      _
    $region19: #{tpu_custom_call.1} parent=1 // pred_check_branch
      %45 = sbr.rel (0) target = $region21
    $region20: #{tpu_custom_call.1} parent=1 // pred_region
      %46 = dma.done [#allocation6], 128
    $region21: #{tpu_custom_call.1} parent=1 // pred_fallthru
      _
    // Predicated region
    $region22: #{tpu_custom_call.1} parent=1 // pred_check
      _
    $region23: #{tpu_custom_call.1} parent=1 // pred_check_branch
      %48 = sbr.rel (0) target = $region25
    $region24: #{tpu_custom_call.1} parent=1 // pred_region
      %49 = dma.done [#allocation6], 128
    $region25: #{tpu_custom_call.1} parent=1 // pred_fallthru
      _
    %v50 = vld [vmem:[#allocation2] sm:$0xff]
    %v51 = vlaneseq
    %v52 = vand.u32 %v51, 127
    %vm53 = vcmp.ne.f32.partialorder %v50, %v50
    %v54 = vsel %vm53, inf, %v50
    %vm55 = vcmask 261120
    %v56 = vsel %vm55, %v54, -inf
    %57 = vmax.xlane.f32.xlu0 %v56
    %v58 = vpop.xlane.xlu0 %57
    %vm59 = vcmp.eq.f32.partialorder %v54, %v58
    %v60 = vsel %vm59, %v52, 32
    %v61 = vsel %vm55, %v60, 2147483647
    %v62 = vand.u32 %v61, 65535
    %v63 = vshra.s32 %v61, 16
    %v64 = vcvt.s32.f32 %v62
    %v65 = vcvt.s32.f32 %v63
    %66 = vmin.xlane.f32.xlu0 %v65
    %v67 = vpop.xlane.xlu0 %66
    %vm68 = vcmp.eq.f32.partialorder %v65, %v67
    %v69 = vsel %vm68, %v64, inf
    %70 = vmin.xlane.f32.xlu0 %v69
    %v71 = vpop.xlane.xlu0 %70
    %v72 = vcvt.f32.s32 %v71
    %v73 = vcvt.f32.s32 %v67
    %v74 = vshll.u32 %v73, 16
    %v75 = vadd.s32 %v74, %v72
    %v76 = vcvt.s32.f32 %v75
    %77 = vxpose.xlu0.b32.start [1/16] %v76, 128
    %78 = vxpose.xlu0.b32.cont [2/16] 0.0, 128
    %79 = vxpose.xlu0.b32.cont [3/16] 0.0, 128
    %80 = vxpose.xlu0.b32.cont [4/16] 0.0, 128
    %81 = vxpose.xlu0.b32.cont [5/16] 0.0, 128
    %82 = vxpose.xlu0.b32.cont [6/16] 0.0, 128
    %83 = vxpose.xlu0.b32.cont [7/16] 0.0, 128
    %84 = vxpose.xlu0.b32.cont [8/16] 0.0, 128
    %85 = vxpose.xlu0.b32.cont [9/16] 0.0, 128
    %86 = vxpose.xlu0.b32.cont [10/16] 0.0, 128
    %87 = vxpose.xlu0.b32.cont [11/16] 0.0, 128
    %88 = vxpose.xlu0.b32.cont [12/16] 0.0, 128
    %89 = vxpose.xlu0.b32.cont [13/16] 0.0, 128
    %90 = vxpose.xlu0.b32.cont [14/16] 0.0, 128
    %91 = vxpose.xlu0.b32.cont [15/16] 0.0, 128
    %92 = vxpose.xlu0.b32.end [16/16] 0.0, 128
    %v93 = vpop.trf.xlu0
    %v94 = vpop.trf.xlu0
    %v95 = vpop.trf.xlu0
    %v96 = vpop.trf.xlu0
    %v97 = vpop.trf.xlu0
    %v98 = vpop.trf.xlu0
    %v99 = vpop.trf.xlu0
    %v100 = vpop.trf.xlu0
    %v101 = vpop.trf.xlu0
    %v102 = vpop.trf.xlu0
    %v103 = vpop.trf.xlu0
    %v104 = vpop.trf.xlu0
    %v105 = vpop.trf.xlu0
    %v106 = vpop.trf.xlu0
    %v107 = vpop.trf.xlu0
    %v108 = vpop.trf.xlu0
    %v109 = vld [vmem:[#allocation5] sm:$0xff]
    %vm110 = vcmp.ne.f32.partialorder %v109, %v109
    %v111 = vsel %vm110, inf, %v109
    %v112 = vsel %vm55, %v111, -inf
    %113 = vmax.xlane.f32.xlu0 %v112
    %v114 = vpop.xlane.xlu0 %113
    %vm115 = vcmp.eq.f32.partialorder %v111, %v114
    %v116 = vsel %vm115, %v52, 32
    %v117 = vsel %vm55, %v116, 2147483647
    %v118 = vand.u32 %v117, 65535
    %v119 = vshra.s32 %v117, 16
    %v120 = vcvt.s32.f32 %v118
    %v121 = vcvt.s32.f32 %v119
    %122 = vmin.xlane.f32.xlu0 %v121
    %v123 = vpop.xlane.xlu0 %122
    %vm124 = vcmp.eq.f32.partialorder %v121, %v123
    %v125 = vsel %vm124, %v120, inf
    %126 = vmin.xlane.f32.xlu0 %v125
    %v127 = vpop.xlane.xlu0 %126
    %v128 = vcvt.f32.s32 %v127
    %v129 = vcvt.f32.s32 %v123
    %v130 = vshll.u32 %v129, 16
    %v131 = vadd.s32 %v130, %v128
    %v132 = vcvt.s32.f32 %v131
    %133 = vxpose.xlu0.b32.start [1/16] %v132, 128
    %134 = vxpose.xlu0.b32.cont [2/16] 0.0, 128
    %135 = vxpose.xlu0.b32.cont [3/16] 0.0, 128
    %136 = vxpose.xlu0.b32.cont [4/16] 0.0, 128
    %137 = vxpose.xlu0.b32.cont [5/16] 0.0, 128
    %138 = vxpose.xlu0.b32.cont [6/16] 0.0, 128
    %139 = vxpose.xlu0.b32.cont [7/16] 0.0, 128
    %140 = vxpose.xlu0.b32.cont [8/16] 0.0, 128
    %141 = vxpose.xlu0.b32.cont [9/16] 0.0, 128
    %142 = vxpose.xlu0.b32.cont [10/16] 0.0, 128
    %143 = vxpose.xlu0.b32.cont [11/16] 0.0, 128
    %144 = vxpose.xlu0.b32.cont [12/16] 0.0, 128
    %145 = vxpose.xlu0.b32.cont [13/16] 0.0, 128
    %146 = vxpose.xlu0.b32.cont [14/16] 0.0, 128
    %147 = vxpose.xlu0.b32.cont [15/16] 0.0, 128
    %148 = vxpose.xlu0.b32.end [16/16] 0.0, 128
    %v149 = vpop.trf.xlu0
    %v150 = vpop.trf.xlu0
    %v151 = vpop.trf.xlu0
    %v152 = vpop.trf.xlu0
    %v153 = vpop.trf.xlu0
    %v154 = vpop.trf.xlu0
    %v155 = vpop.trf.xlu0
    %v156 = vpop.trf.xlu0
    %v157 = vpop.trf.xlu0
    %v158 = vpop.trf.xlu0
    %v159 = vpop.trf.xlu0
    %v160 = vpop.trf.xlu0
    %v161 = vpop.trf.xlu0
    %v162 = vpop.trf.xlu0
    %v163 = vpop.trf.xlu0
    %v164 = vpop.trf.xlu0
    %vm165 = vcmp.eq.f32.partialorder %v93, %v149
    %v166 = vsel %vm165, 1, 0
    %v167 = vcvt.s32.f32 %v166
    %vm168 = vcmask 64512
    %169 = vst.msk [vmem:[#allocation8] sm:$0xff] %vm168, 0.0
    %vm170 = vcmask 57344
    %171 = vst.msk [vmem:[#allocation8] sm:$0x1] %vm170, %v167
    %172 = vst.msk [vmem:[#allocation8 + $0x1] sm:$0x1] %vm170, %v149
    %173 = vst.msk [vmem:[#allocation8 + $0x2] sm:$0x1] %vm170, %v93
    %v174 = vld [vmem:[#allocation7] sm:$0xff]
    %vm175 = vcmp.eq.s32.totalorder %v52, %v75
    %v176 = vsel %vm175, %v174, 0.0
    %v177 = vsel %vm55, %v176, 0.0
    %178 = vadd.xlane.f32.xlu0 %v177
    %v179 = vpop.xlane.xlu0 %178
    %vm180 = vcmp.eq.s32.totalorder %v52, %v131
    %v181 = vsel %vm180, %v174, 0.0
    %v182 = vsel %vm55, %v181, 0.0
    %183 = vadd.xlane.f32.xlu0 %v182
    %v184 = vpop.xlane.xlu0 %183
    %185 = vxpose.xlu0.b32.start [1/16] %v179, 128
    %186 = vxpose.xlu0.b32.cont [2/16] 0.0, 128
    %187 = vxpose.xlu0.b32.cont [3/16] 0.0, 128
    %188 = vxpose.xlu0.b32.cont [4/16] 0.0, 128
    %189 = vxpose.xlu0.b32.cont [5/16] 0.0, 128
    %190 = vxpose.xlu0.b32.cont [6/16] 0.0, 128
    %191 = vxpose.xlu0.b32.cont [7/16] 0.0, 128
    %192 = vxpose.xlu0.b32.cont [8/16] 0.0, 128
    %193 = vxpose.xlu0.b32.cont [9/16] 0.0, 128
    %194 = vxpose.xlu0.b32.cont [10/16] 0.0, 128
    %195 = vxpose.xlu0.b32.cont [11/16] 0.0, 128
    %196 = vxpose.xlu0.b32.cont [12/16] 0.0, 128
    %197 = vxpose.xlu0.b32.cont [13/16] 0.0, 128
    %198 = vxpose.xlu0.b32.cont [14/16] 0.0, 128
    %199 = vxpose.xlu0.b32.cont [15/16] 0.0, 128
    %200 = vxpose.xlu0.b32.end [16/16] 0.0, 128
    %v201 = vpop.trf.xlu0
    %v202 = vpop.trf.xlu0
    %v203 = vpop.trf.xlu0
    %v204 = vpop.trf.xlu0
    %v205 = vpop.trf.xlu0
    %v206 = vpop.trf.xlu0
    %v207 = vpop.trf.xlu0
    %v208 = vpop.trf.xlu0
    %v209 = vpop.trf.xlu0
    %v210 = vpop.trf.xlu0
    %v211 = vpop.trf.xlu0
    %v212 = vpop.trf.xlu0
    %v213 = vpop.trf.xlu0
    %v214 = vpop.trf.xlu0
    %v215 = vpop.trf.xlu0
    %v216 = vpop.trf.xlu0
    %217 = vst.msk [vmem:[#allocation8 + $0x3] sm:$0x1] %vm170, %v201
    %218 = vxpose.xlu0.b32.start [1/16] %v184, 128
    %219 = vxpose.xlu0.b32.cont [2/16] 0.0, 128
    %220 = vxpose.xlu0.b32.cont [3/16] 0.0, 128
    %221 = vxpose.xlu0.b32.cont [4/16] 0.0, 128
    %222 = vxpose.xlu0.b32.cont [5/16] 0.0, 128
    %223 = vxpose.xlu0.b32.cont [6/16] 0.0, 128
    %224 = vxpose.xlu0.b32.cont [7/16] 0.0, 128
    %225 = vxpose.xlu0.b32.cont [8/16] 0.0, 128
    %226 = vxpose.xlu0.b32.cont [9/16] 0.0, 128
    %227 = vxpose.xlu0.b32.cont [10/16] 0.0, 128
    %228 = vxpose.xlu0.b32.cont [11/16] 0.0, 128
    %229 = vxpose.xlu0.b32.cont [12/16] 0.0, 128
    %230 = vxpose.xlu0.b32.cont [13/16] 0.0, 128
    %231 = vxpose.xlu0.b32.cont [14/16] 0.0, 128
    %232 = vxpose.xlu0.b32.cont [15/16] 0.0, 128
    %233 = vxpose.xlu0.b32.end [16/16] 0.0, 128
    %v234 = vpop.trf.xlu0
    %v235 = vpop.trf.xlu0
    %v236 = vpop.trf.xlu0
    %v237 = vpop.trf.xlu0
    %v238 = vpop.trf.xlu0
    %v239 = vpop.trf.xlu0
    %v240 = vpop.trf.xlu0
    %v241 = vpop.trf.xlu0
    %v242 = vpop.trf.xlu0
    %v243 = vpop.trf.xlu0
    %v244 = vpop.trf.xlu0
    %v245 = vpop.trf.xlu0
    %v246 = vpop.trf.xlu0
    %v247 = vpop.trf.xlu0
    %v248 = vpop.trf.xlu0
    %v249 = vpop.trf.xlu0
    %250 = vst.msk [vmem:[#allocation8 + $0x4] sm:$0x1] %vm170, %v234
    // Predicated region
    $region26: #{tpu_custom_call.1} parent=1 // pred_check
      _
    $region27: #{tpu_custom_call.1} parent=1 // pred_check_branch
      %252 = sbr.rel (0) target = $region29
    $region28: #{tpu_custom_call.1} parent=1 // pred_region
      %s254 = ssub.s32 128, 128
      %255 = vsyncadd [#allocation4], %s254
      %s257 = sshll.u32 [#allocation8], 4
      %s258 = int_to_ptr.vmem [resolvable:$true] %s257
      %260 = dma.vmem_to_hbm [thread:$0]  %s258, 128, %s3, [#allocation4]
    $region29: #{tpu_custom_call.1} parent=1 // pred_fallthru
      _
    // Predicated region
    $region30: #{tpu_custom_call.1} parent=1 // pred_check
      _
    $region31: #{tpu_custom_call.1} parent=1 // pred_check_branch
      %262 = sbr.rel (0) target = $region33
    $region32: #{tpu_custom_call.1} parent=1 // pred_region
      %263 = dma.done [#allocation4], 128
    $region33: #{tpu_custom_call.1} parent=1 // pred_fallthru
      _
    %264 = vsyncpa [#allocation3], 1
    %265 = vsyncpa [#allocation6], 1
    %266 = vsyncpa [#allocation4], 1

// kernel: tpu_custom_call.1
$region0: #{tpu_custom_call.1}
  #allocation0 [shape = 'u32[]', space=smem, size = 0x4, offset = 0x4, fixed_abs, tag = 'smem constant byte address 0x4 - core index']
  #allocation1 [shape = 'u32[144,128]{1,0:T(1,128)}', space=vmem, size = 0x12000, scoped, tag = 'internal scratch']
  %s0 = inlined_call_operand.hbm [shape: f32[8,32], index: 0, kind: input, shape index: {}]
  %s1 = inlined_call_operand.hbm [shape: f32[8,32], index: 1, kind: input, shape index: {}]
  %s2 = inlined_call_operand.hbm [shape: f32[8,32], index: 2, kind: input, shape index: {}]
  %s3 = inlined_call_operand.hbm [shape: f32[8,8], index: 3, kind: output, shape index: {}]
  %s4 = sld [smem:[#allocation0]]
  $region34: #{tpu_custom_call.1} parent=0
    _
  %s6 = ssub.s32 1, %s4
  %s7 = scalar_select 0, %s6, %s4
  $region1: #{tpu_custom_call.1} parent=0
    #allocation2 [shape = 'u8[4096]{0}', space=vmem, size = 0x1000, scoped, tag = 'input window, operand 0, single buffered']
    #allocation3 [shape = 's32[1]{0}', space=sflag, size = 0x4, scoped, tag = 'scoped memory for tpu_custom_call.1']
    #allocation4 [shape = 's32[1]{0}', space=sflag, size = 0x4, scoped, tag = 'scoped memory for tpu_custom_call.1']
    #allocation5 [shape = 'u8[4096]{0}', space=vmem, size = 0x1000, scoped, tag = 'input window, operand 1, single buffered']
    #allocation6 [shape = 's32[1]{0}', space=sflag, size = 0x4, scoped, tag = 'scoped memory for tpu_custom_call.1']
    #allocation7 [shape = 'u8[4096]{0}', space=vmem, size = 0x1000, scoped, tag = 'input window, operand 2, single buffered']
    #allocation8 [shape = 'u8[4096]{0}', space=vmem, size = 0x1000, scoped, tag = 'output window, operand 0, single buffered']
    %8 = vsyncpa [#allocation3], 0
    %9 = vsyncpa [#allocation6], 0
    %10 = vsyncpa [#allocation4], 0
    // Predicated region
    $region2: #{tpu_custom_call.1} parent=1 // pred_check
      _
    $region3: #{tpu_custom_call.1} parent=1 // pred_check_branch
      %12 = sbr.rel (0) target = $region5
    $region4: #{tpu_custom_call.1} parent=1 // pred_region
      %s14 = ssub.s32 128, 128
      %15 = vsyncadd [#allocation3], %s14
      %s17 = sshll.u32 [#allocation2], 4
      %s18 = int_to_ptr.vmem [resolvable:$true] %s17
      %20 = dma.hbm_to_vmem [thread:$0]  %s0, 128, %s18, [#allocation3]
    $region5: #{tpu_custom_call.1} parent=1 // pred_fallthru
      _
    // Predicated region
    $region6: #{tpu_custom_call.1} parent=1 // pred_check
      _
    $region7: #{tpu_custom_call.1} parent=1 // pred_check_branch
      %22 = sbr.rel (0) target = $region9
    $region8: #{tpu_custom_call.1} parent=1 // pred_region
      %s24 = ssub.s32 128, 128
      %25 = vsyncadd [#allocation6], %s24
      %s27 = sshll.u32 [#allocation5], 4
      %s28 = int_to_ptr.vmem [resolvable:$true] %s27
      %30 = dma.hbm_to_vmem [thread:$0]  %s1, 128, %s28, [#allocation6]
    $region9: #{tpu_custom_call.1} parent=1 // pred_fallthru
      _
    // Predicated region
    $region10: #{tpu_custom_call.1} parent=1 // pred_check
      _
    $region11: #{tpu_custom_call.1} parent=1 // pred_check_branch
      %32 = sbr.rel (0) target = $region13
    $region12: #{tpu_custom_call.1} parent=1 // pred_region
      %s34 = ssub.s32 128, 128
      %35 = vsyncadd [#allocation6], %s34
      %s37 = sshll.u32 [#allocation7], 4
      %s38 = int_to_ptr.vmem [resolvable:$true] %s37
      %40 = dma.hbm_to_vmem [thread:$0]  %s2, 128, %s38, [#allocation6]
    $region13: #{tpu_custom_call.1} parent=1 // pred_fallthru
      _
    // Predicated region
    $region14: #{tpu_custom_call.1} parent=1 // pred_check
      _
    $region15: #{tpu_custom_call.1} parent=1 // pred_check_branch
      %42 = sbr.rel (0) target = $region17
    $region16: #{tpu_custom_call.1} parent=1 // pred_region
      %43 = dma.done [#allocation3], 128
    $region17: #{tpu_custom_call.1} parent=1 // pred_fallthru
      _
    // Predicated region
    $region18: #{tpu_custom_call.1} parent=1 // pred_check
      _
    $region19: #{tpu_custom_call.1} parent=1 // pred_check_branch
      %45 = sbr.rel (0) target = $region21
    $region20: #{tpu_custom_call.1} parent=1 // pred_region
      %46 = dma.done [#allocation6], 128
    $region21: #{tpu_custom_call.1} parent=1 // pred_fallthru
      _
    // Predicated region
    $region22: #{tpu_custom_call.1} parent=1 // pred_check
      _
    $region23: #{tpu_custom_call.1} parent=1 // pred_check_branch
      %48 = sbr.rel (0) target = $region25
    $region24: #{tpu_custom_call.1} parent=1 // pred_region
      %49 = dma.done [#allocation6], 128
    $region25: #{tpu_custom_call.1} parent=1 // pred_fallthru
      _
    %v50 = vld [vmem:[#allocation2] sm:$0xff]
    %v51 = vlaneseq
    %v52 = vand.u32 %v51, 127
    %vm53 = vcmp.ne.f32.partialorder %v50, %v50
    %v54 = vsel %vm53, inf, %v50
    %vm55 = vcmask 261120
    %v56 = vsel %vm55, %v54, -inf
    %57 = vmax.xlane.f32.xlu0 %v56
    %v58 = vpop.xlane.xlu0 %57
    %vm59 = vcmp.eq.f32.partialorder %v54, %v58
    %v60 = vsel %vm59, %v52, 32
    %v61 = vsel %vm55, %v60, 2147483647
    %v62 = vand.u32 %v61, 65535
    %v63 = vshra.s32 %v61, 16
    %v64 = vcvt.s32.f32 %v62
    %v65 = vcvt.s32.f32 %v63
    %66 = vmin.xlane.f32.xlu0 %v65
    %v67 = vpop.xlane.xlu0 %66
    %vm68 = vcmp.eq.f32.partialorder %v65, %v67
    %v69 = vsel %vm68, %v64, inf
    %70 = vmin.xlane.f32.xlu0 %v69
    %v71 = vpop.xlane.xlu0 %70
    %v72 = vcvt.f32.s32 %v71
    %v73 = vcvt.f32.s32 %v67
    %v74 = vshll.u32 %v73, 16
    %v75 = vadd.s32 %v74, %v72
    %v76 = vcvt.s32.f32 %v75
    %v77 = vlaneseq
    %v78 = vshrl.u32 %v77, 7
    %vm79 = vcmp.eq.s32.totalorder %v78, %v52
    %v80 = vsel %vm79, %v76, 0.0
    %vm81 = vcmask 64512
    %v82 = vsel %vm81, %v80, 0.0
    %v83 = vrot.slane %v82, 4
    %v84 = vadd.f32 %v82, %v83
    %v85 = vrot.slane %v84, 2
    %v86 = vadd.f32 %v84, %v85
    %v87 = vrot.slane %v86, 1
    %v88 = vadd.f32 %v86, %v87
    %v89 = vld [vmem:[#allocation5] sm:$0xff]
    %vm90 = vcmp.ne.f32.partialorder %v89, %v89
    %v91 = vsel %vm90, inf, %v89
    %v92 = vsel %vm55, %v91, -inf
    %93 = vmax.xlane.f32.xlu0 %v92
    %v94 = vpop.xlane.xlu0 %93
    %vm95 = vcmp.eq.f32.partialorder %v91, %v94
    %v96 = vsel %vm95, %v52, 32
    %v97 = vsel %vm55, %v96, 2147483647
    %v98 = vand.u32 %v97, 65535
    %v99 = vshra.s32 %v97, 16
    %v100 = vcvt.s32.f32 %v98
    %v101 = vcvt.s32.f32 %v99
    %102 = vmin.xlane.f32.xlu0 %v101
    %v103 = vpop.xlane.xlu0 %102
    %vm104 = vcmp.eq.f32.partialorder %v101, %v103
    %v105 = vsel %vm104, %v100, inf
    %106 = vmin.xlane.f32.xlu0 %v105
    %v107 = vpop.xlane.xlu0 %106
    %v108 = vcvt.f32.s32 %v107
    %v109 = vcvt.f32.s32 %v103
    %v110 = vshll.u32 %v109, 16
    %v111 = vadd.s32 %v110, %v108
    %v112 = vcvt.s32.f32 %v111
    %v113 = vsel %vm79, %v112, 0.0
    %v114 = vsel %vm81, %v113, 0.0
    %v115 = vrot.slane %v114, 4
    %v116 = vadd.f32 %v114, %v115
    %v117 = vrot.slane %v116, 2
    %v118 = vadd.f32 %v116, %v117
    %v119 = vrot.slane %v118, 1
    %v120 = vadd.f32 %v118, %v119
    %vm121 = vcmp.eq.f32.partialorder %v88, %v120
    %v122 = vsel %vm121, 1, 0
    %v123 = vcvt.s32.f32 %v122
    %124 = vst.msk [vmem:[#allocation8] sm:$0xff] %vm81, 0.0
    %vm125 = vcmask 57344
    %126 = vst.msk [vmem:[#allocation8] sm:$0x1] %vm125, %v123
    %127 = vst.msk [vmem:[#allocation8 + $0x1] sm:$0x1] %vm125, %v120
    %128 = vst.msk [vmem:[#allocation8 + $0x2] sm:$0x1] %vm125, %v88
    %v129 = vld [vmem:[#allocation7] sm:$0xff]
    %vm130 = vcmp.eq.s32.totalorder %v52, %v75
    %v131 = vsel %vm130, %v129, 0.0
    %v132 = vsel %vm55, %v131, 0.0
    %133 = vadd.xlane.f32.xlu0 %v132
    %v134 = vpop.xlane.xlu0 %133
    %vm135 = vcmp.eq.s32.totalorder %v52, %v111
    %v136 = vsel %vm135, %v129, 0.0
    %v137 = vsel %vm55, %v136, 0.0
    %138 = vadd.xlane.f32.xlu0 %v137
    %v139 = vpop.xlane.xlu0 %138
    %v140 = vsel %vm79, %v134, 0.0
    %v141 = vsel %vm81, %v140, 0.0
    %v142 = vrot.slane %v141, 4
    %v143 = vadd.f32 %v141, %v142
    %v144 = vrot.slane %v143, 2
    %v145 = vadd.f32 %v143, %v144
    %v146 = vrot.slane %v145, 1
    %v147 = vadd.f32 %v145, %v146
    %148 = vst.msk [vmem:[#allocation8 + $0x3] sm:$0x1] %vm125, %v147
    %v149 = vsel %vm79, %v139, 0.0
    %v150 = vsel %vm81, %v149, 0.0
    %v151 = vrot.slane %v150, 4
    %v152 = vadd.f32 %v150, %v151
    %v153 = vrot.slane %v152, 2
    %v154 = vadd.f32 %v152, %v153
    %v155 = vrot.slane %v154, 1
    %v156 = vadd.f32 %v154, %v155
    %157 = vst.msk [vmem:[#allocation8 + $0x4] sm:$0x1] %vm125, %v156
    // Predicated region
    $region26: #{tpu_custom_call.1} parent=1 // pred_check
      _
    $region27: #{tpu_custom_call.1} parent=1 // pred_check_branch
      %159 = sbr.rel (0) target = $region29
    $region28: #{tpu_custom_call.1} parent=1 // pred_region
      %s161 = ssub.s32 128, 128
      %162 = vsyncadd [#allocation4], %s161
      %s164 = sshll.u32 [#allocation8], 4
      %s165 = int_to_ptr.vmem [resolvable:$true] %s164
      %167 = dma.vmem_to_hbm [thread:$0]  %s165, 128, %s3, [#allocation4]
    $region29: #{tpu_custom_call.1} parent=1 // pred_fallthru
      _
    // Predicated region
    $region30: #{tpu_custom_call.1} parent=1 // pred_check
      _
    $region31: #{tpu_custom_call.1} parent=1 // pred_check_branch
      %169 = sbr.rel (0) target = $region33
    $region32: #{tpu_custom_call.1} parent=1 // pred_region
      %170 = dma.done [#allocation4], 128
    $region33: #{tpu_custom_call.1} parent=1 // pred_fallthru
      _
    %171 = vsyncpa [#allocation3], 1
    %172 = vsyncpa [#allocation6], 1
    %173 = vsyncpa [#allocation4], 1

</llo_original>
